<compile_context>
chip_gen: v7x
topology: tpu7x:2x2x1
jax: 0.10.0
libtpu: 0.0.40
codegen_flags: <defaults>
</compile_context>

<pallas_src>
import functools

import jax
import jax.numpy as jnp
from jax.experimental import pallas as pl
from jax.experimental.pallas import tpu as pltpu


# --------------------------- hardware-aware sizing ---------------------------

_HW_CACHE = None


def _hw_params():
    """(vmem_limit_bytes, per-slab byte budget), generation aware."""
    global _HW_CACHE
    if _HW_CACHE is None:
        vmem_phys = None
        try:
            vmem_phys = getattr(pltpu.get_tpu_info(), "vmem_capacity_bytes", None)
        except Exception:
            vmem_phys = None
        if vmem_phys is not None and vmem_phys > 96 * 1024 * 1024:
            # v5e / v6e class: 128 MiB physical VMEM per TensorCore.
            _HW_CACHE = (96 * 1024 * 1024, 4 * 1024 * 1024)
        else:
            # v7x class (64 MiB physical) or unknown: leave headroom for the
            # double-buffered in/out slabs plus in-kernel f32 temporaries.
            _HW_CACHE = (44 * 1024 * 1024, 3 * 1024 * 1024)
    return _HW_CACHE


def _pack_factor(L, D):
    """Lane-packing factor k for (B, L, D) -> (B, L//k, k*D) when D is small.

    k is the largest power of two with k*D <= 128 and L % k == 0 (power of two
    so the in-kernel lane-group combine is a log2(k) roll-and-add tree)."""
    if D >= 128:
        return 1
    k = 1
    while (2 * k * D) <= 128 and L % (2 * k) == 0:
        k *= 2
    return k


def _choose_tiles(B, L, D, slab_budget):
    """Pick (TB, TD) for a (TB, L, TD) block.

    Prefer TD = full D (fully contiguous HBM rows, fewest DMA descriptors);
    only tile the feature axis in 128-lane multiples when a full-D row slab
    exceeds the budget (guards long L / huge D).  Never tiles L."""
    candidates = [D]
    for td in (2048, 1024, 512, 256, 128):
        if td < D and D % td == 0:
            candidates.append(td)
    for td in candidates:
        row_bytes = L * td * 4                 # budget against f32 (in-kernel temps)
        if row_bytes <= slab_budget:
            tb = min(B, max(1, slab_budget // row_bytes))
            while B % tb != 0:
                tb -= 1
            return tb, td
    # Even (1, L, smallest TD) exceeds the budget (extreme L): take it; the
    # scoped vmem limit still leaves some double-buffer headroom.
    # TODO(synk): add an "arbitrary" L grid axis with accumulator scratch for extreme L.
    return 1, candidates[-1]


# ----------------------------- kernels --------------------------------------


def _norm_kernel(x_ref, m_ref, xn_ref, stats_ref, *, d_group):
    # x_ref / m_ref / xn_ref : (TB, L, LANES)       stats_ref : (TB, 2, LANES)
    # If d_group is not None the feature axis is lane-packed: lane g*d + f holds
    # feature f of time step (l*k + g); per-(b, f) reductions then need a
    # lane-group combine, done with a log2(k) roll-and-add tree (XLU slot).
    lanes = x_ref.shape[-1]
    x = x_ref[...].astype(jnp.float32)
    m = m_ref[...]                                   # {0, 1}; keep native dtype (no f32 copy)

    def group_allreduce(row):                        # row: (TB, 1, LANES) f32
        if d_group is None:
            return row
        shift = d_group
        while shift < lanes:
            row = row + pltpu.roll(row, shift, axis=2)
            shift *= 2
        return row

    # Observations per (b, feature).  Clamp guards all-missing columns (the
    # PyTorch reference would emit inf/NaN there).
    cnt = jnp.maximum(
        group_allreduce(jnp.sum(m, axis=1, keepdims=True, dtype=jnp.float32)), 1.0)
    inv_cnt = 1.0 / cnt

    # NOTE: sums raw x, exactly matching torch.sum(x_encoded, dim=1);
    # imputation datasets supply x already zeroed at mask == 0 positions.
    means = group_allreduce(jnp.sum(x, axis=1, keepdims=True)) * inv_cnt

    xc = (x - means) * m                             # masked_fill via multiply

    var = group_allreduce(jnp.sum(xc * xc, axis=1, keepdims=True)) * inv_cnt + 1e-5
    inv_std = jax.lax.rsqrt(var)                     # single EUP op per (b, f)
    stdev = var * inv_std                            # sqrt(var) without a 2nd transcendental

    xn_ref[...] = (xc * inv_std).astype(xn_ref.dtype)
    stats_ref[:, 0:1, :] = stdev.astype(stats_ref.dtype)
    stats_ref[:, 1:2, :] = means.astype(stats_ref.dtype)


def _denorm_kernel(dec_ref, stats_ref, out_ref):
    # dec_ref / out_ref : (TB, L, LANES)     stats_ref : (TB, 2, LANES) = [stdev; means]
    s = stats_ref[...].astype(jnp.float32)
    out = dec_ref[...].astype(jnp.float32) * s[:, 0:1, :] + s[:, 1:2, :]
    out_ref[...] = out.astype(out_ref.dtype)


# ----------------------------- pallas_call wrappers --------------------------


def _norm_call(x_w, m_w, d_group):
    B, Lp, Dp = x_w.shape
    vmem_limit, slab_budget = _hw_params()
    TB, TD = _choose_tiles(B, Lp, Dp, slab_budget)
    grid = (B // TB, Dp // TD)
    data_spec = pl.BlockSpec((TB, Lp, TD), lambda i, j: (i, 0, j))
    stats_spec = pl.BlockSpec((TB, 2, TD), lambda i, j: (i, 0, j))
    return pl.pallas_call(
        functools.partial(_norm_kernel, d_group=d_group),
        grid=grid,
        in_specs=[data_spec, data_spec],
        out_specs=[data_spec, stats_spec],
        out_shape=[
            jax.ShapeDtypeStruct((B, Lp, Dp), x_w.dtype),
            jax.ShapeDtypeStruct((B, 2, Dp), jnp.float32),
        ],
        compiler_params=pltpu.CompilerParams(
            dimension_semantics=("parallel", "parallel"),
            vmem_limit_bytes=vmem_limit,
        ),
    )(x_w, m_w)


def _denorm_call(dec_w, stats_w):
    B, Lp, Dp = dec_w.shape
    vmem_limit, slab_budget = _hw_params()
    TB, TD = _choose_tiles(B, Lp, Dp, slab_budget)
    grid = (B // TB, Dp // TD)
    data_spec = pl.BlockSpec((TB, Lp, TD), lambda i, j: (i, 0, j))
    stats_spec = pl.BlockSpec((TB, 2, TD), lambda i, j: (i, 0, j))
    return pl.pallas_call(
        _denorm_kernel,
        grid=grid,
        in_specs=[data_spec, stats_spec],
        out_specs=data_spec,
        out_shape=jax.ShapeDtypeStruct((B, Lp, Dp), dec_w.dtype),
        compiler_params=pltpu.CompilerParams(
            dimension_semantics=("parallel", "parallel"),
            vmem_limit_bytes=vmem_limit,
        ),
    )(dec_w, stats_w)


def _to_workspace(t, k):
    if k == 1:
        return t
    B, L, D = t.shape
    return t.reshape(B, L // k, k * D)


def _normalize_workspace(x, mask):
    """Runs the norm kernel in (possibly lane-packed) workspace layout.

    Returns (xn_w, stats_w, k) where stats_w is (B, 2, k*D) with stdev in row 0
    and means in row 1 (values replicated across the k lane groups)."""
    _, L, D = x.shape
    k = _pack_factor(L, D)
    d_group = D if k > 1 else None
    xn_w, stats_w = _norm_call(_to_workspace(x, k), _to_workspace(mask, k), d_group)
    return xn_w, stats_w, k


# ----------------------------- public API ------------------------------------


def normalization_non_stationary_transformer(x_encoded, mask):
    B, L, D = x_encoded.shape
    xn_w, stats_w, _ = _normalize_workspace(x_encoded, mask)
    xn = xn_w.reshape(B, L, D)
    stdev = stats_w[:, 0:1, :D]          # lane group 0 carries the D distinct features
    means = stats_w[:, 1:2, :D]
    return xn, stdev, means


def denormalization_non_stationary_transformer(decoded_out, stdev, means):
    B, L, D = decoded_out.shape
    if stdev.ndim == 2:
        stdev = stdev[:, None, :]
    if means.ndim == 2:
        means = means[:, None, :]
    # PyTorch uses only row 0 of stdev / means.
    stats = jnp.concatenate([stdev[:, 0:1, :], means[:, 0:1, :]], axis=1)
    stats = stats.astype(jnp.float32)                           # (B, 2, D), tiny
    k = _pack_factor(L, D)
    dec_w = _to_workspace(decoded_out, k)
    stats_w = jnp.tile(stats, (1, 1, k)) if k > 1 else stats    # (B, 2, k*D), tiny
    out_w = _denorm_call(dec_w, stats_w)
    return out_w.reshape(B, L, D)


# ----------------------------- module ----------------------------------------


class Config:
    def __init__(self, sequence_len, label_len, prediction_len):
        self.sequence_len = sequence_len
        self.label_len = label_len
        self.prediction_len = prediction_len


class BaseImputer:
    """JAX/Pallas port of the PyTorch BaseImputer base class."""

    def __init__(self, config):
        self.config = config
        self.sequence_len = config.sequence_len
        self.label_len = config.label_len
        self.prediction_len = config.prediction_len

    def forward(self, x_encoded, x_mark_encoded, mask):
        dec_out = self.imputation(x_encoded, x_mark_encoded, mask)
        return dec_out

    def normalization_non_stationary_transformer(self, x_encoded, mask):
        return normalization_non_stationary_transformer(x_encoded, mask)

    def denormalization_non_stationary_transformer(self, decoded_out, stdev, means):
        return denormalization_non_stationary_transformer(decoded_out, stdev, means)

    def imputation(self, x_encoded, x_mark_encoded, mask):
        # TODO(synk): `imputation` is abstract in the PyTorch base class; an
        # identity in normalized space is used so the Pallas normalize /
        # denormalize kernels are exercised end to end.  Fused path: the packed
        # (B, 2, k*D) stats tensor from the norm kernel is fed straight into the
        # denorm kernel (no wrapper-side slicing of big tensors).
        B, L, D = x_encoded.shape
        xn_w, stats_w, _ = _normalize_workspace(x_encoded, mask)
        dec_w = xn_w                       # placeholder for the subclass-specific model
        out_w = _denorm_call(dec_w, stats_w)
        return out_w.reshape(B, L, D)


# ----------------------------- driver -----------------------------------------


def _reference_norm(x, mask):
    x = x.astype(jnp.float32)
    m = mask.astype(jnp.float32)
    cnt = jnp.sum(m, axis=1, keepdims=True)
    means = jnp.sum(x, axis=1, keepdims=True) / cnt
    xc = (x - means) * m
    stdev = jnp.sqrt(jnp.sum(xc * xc, axis=1, keepdims=True) / cnt + 1e-5)
    return xc / stdev, stdev, means


def _run_case(case_key, B, L, D, x_dtype, atol, rtol):
    k1, k2 = jax.random.split(case_key)
    x = jax.random.normal(k1, (B, L, D), dtype=jnp.float32)
    mask = (jax.random.uniform(k2, (B, L, D)) < 0.75).astype(jnp.float32)
    mask = mask.at[:, 0, :].set(1.0)               # >= 1 observation per (b, d) column
    x = (x * mask).astype(x_dtype)                 # imputation datasets zero missing entries
    x_mark = jnp.zeros((B, L, 4), dtype=jnp.float32)

    imputer = BaseImputer(Config(sequence_len=L, label_len=max(1, L // 2), prediction_len=0))

    xn_ref, stdev_ref, means_ref = _reference_norm(x, mask)
    out_ref = xn_ref * stdev_ref + means_ref

    xn, stdev, means = imputer.normalization_non_stationary_transformer(x, mask)
    out_api = imputer.denormalization_non_stationary_transformer(xn, stdev, means)
    out_fused = imputer.forward(x, x_mark, mask)
    jax.block_until_ready((xn, stdev, means, out_api, out_fused))

    ok = True
    ok &= bool(jnp.allclose(xn.astype(jnp.float32), xn_ref, atol=atol, rtol=rtol))
    ok &= bool(jnp.allclose(stdev.astype(jnp.float32), stdev_ref, atol=atol, rtol=rtol))
    ok &= bool(jnp.allclose(means.astype(jnp.float32), means_ref, atol=atol, rtol=rtol))
    ok &= bool(jnp.allclose(out_api.astype(jnp.float32), out_ref, atol=atol, rtol=rtol))
    ok &= bool(jnp.allclose(out_fused.astype(jnp.float32), out_ref, atol=atol, rtol=rtol))
    ok &= bool(jnp.all(jnp.isfinite(out_fused.astype(jnp.float32))))
    return ok


if __name__ == "__main__":
    key = jax.random.PRNGKey(0)
    cases = [
        # (B, L, D, dtype, atol, rtol)
        (2, 16, 8,   jnp.float32,  1e-4, 1e-4),   # lane-packed path (k=16 -> 128 lanes)
        (3, 25, 4,   jnp.float32,  1e-4, 1e-4),   # small-D fallback (L odd -> no packing)
        (2, 12, 256, jnp.float32,  1e-4, 1e-4),   # full-D contiguous path, D >= 128
        (2, 16, 8,   jnp.bfloat16, 6e-2, 6e-2),   # lane-packed path, bf16 activations
    ]
    keys = jax.random.split(key, len(cases))
    all_ok = True
    for case_key, (B, L, D, dt, atol, rtol) in zip(keys, cases):
        ok = _run_case(case_key, B, L, D, dt, atol, rtol)
        if not ok:
            print("MISMATCH for case B=%d L=%d D=%d dtype=%s" % (B, L, D, dt))
        all_ok = all_ok and ok

    assert all_ok
    print("KERNEL_OK")
</pallas_src>

<mosaic_0001>
module attributes {stable_mosaic.version = 11 : i64} {
  func.func @_norm_kernel(%arg0: i32, %arg1: i32, %arg2: memref<2x1x128xf32, #tpu.memory_space<vmem>>, %arg3: memref<2x1x128xf32, #tpu.memory_space<vmem>>, %arg4: memref<2x1x128xf32, #tpu.memory_space<vmem>>, %arg5: memref<2x2x128xf32, #tpu.memory_space<vmem>>) attributes {dimension_semantics = [#tpu.dimension_semantics<parallel>, #tpu.dimension_semantics<parallel>], iteration_bounds = array<i64: 1, 1>, scalar_prefetch = 0 : i64, scratch_operands = 0 : i64, tpu.core_type = #tpu.core_type<tc>, window_params = [{transform_indices = @transform_0, window_bounds = array<i64: 2, 1, 128>}, {transform_indices = @transform_1, window_bounds = array<i64: 2, 1, 128>}, {transform_indices = @transform_2, window_bounds = array<i64: 2, 1, 128>}, {transform_indices = @transform_3, window_bounds = array<i64: 2, 2, 128>}]} {
    %c0 = arith.constant 0 : index
    %c0_0 = arith.constant 0 : index
    %c0_1 = arith.constant 0 : index
    %0 = vector.load %arg2[%c0, %c0_0, %c0_1] : memref<2x1x128xf32, #tpu.memory_space<vmem>>, vector<2x1x128xf32>
    %c0_2 = arith.constant 0 : index
    %c0_3 = arith.constant 0 : index
    %c0_4 = arith.constant 0 : index
    %1 = vector.load %arg3[%c0_2, %c0_3, %c0_4] : memref<2x1x128xf32, #tpu.memory_space<vmem>>, vector<2x1x128xf32>
    %cst = arith.constant dense<0.000000e+00> : vector<2x128xf32>
    %2 = vector.multi_reduction <add>, %1, %cst [1] : vector<2x1x128xf32> to vector<2x128xf32>
    %3 = vector.shape_cast %2 : vector<2x128xf32> to vector<2x1x128xf32>
    %c8_i32 = arith.constant 8 : i32
    %4 = tpu.dynamic_rotate %3 by %c8_i32 dim 2 : vector<2x1x128xf32>, i32 -> vector<2x1x128xf32>
    %5 = arith.addf %3, %4 : vector<2x1x128xf32>
    %c16_i32 = arith.constant 16 : i32
    %6 = tpu.dynamic_rotate %5 by %c16_i32 dim 2 : vector<2x1x128xf32>, i32 -> vector<2x1x128xf32>
    %7 = arith.addf %5, %6 : vector<2x1x128xf32>
    %c32_i32 = arith.constant 32 : i32
    %8 = tpu.dynamic_rotate %7 by %c32_i32 dim 2 : vector<2x1x128xf32>, i32 -> vector<2x1x128xf32>
    %9 = arith.addf %7, %8 : vector<2x1x128xf32>
    %c64_i32 = arith.constant 64 : i32
    %10 = tpu.dynamic_rotate %9 by %c64_i32 dim 2 : vector<2x1x128xf32>, i32 -> vector<2x1x128xf32>
    %11 = arith.addf %9, %10 : vector<2x1x128xf32>
    %cst_5 = arith.constant 1.000000e+00 : f32
    %12 = vector.broadcast %cst_5 : f32 to vector<2x1x128xf32>
    %13 = arith.maximumf %11, %12 : vector<2x1x128xf32>
    %cst_6 = arith.constant 1.000000e+00 : f32
    %14 = vector.broadcast %cst_6 : f32 to vector<2x1x128xf32>
    %15 = arith.divf %14, %13 : vector<2x1x128xf32>
    %cst_7 = arith.constant dense<0.000000e+00> : vector<2x128xf32>
    %16 = vector.multi_reduction <add>, %0, %cst_7 [1] : vector<2x1x128xf32> to vector<2x128xf32>
    %17 = vector.shape_cast %16 : vector<2x128xf32> to vector<2x1x128xf32>
    %c8_i32_8 = arith.constant 8 : i32
    %18 = tpu.dynamic_rotate %17 by %c8_i32_8 dim 2 : vector<2x1x128xf32>, i32 -> vector<2x1x128xf32>
    %19 = arith.addf %17, %18 : vector<2x1x128xf32>
    %c16_i32_9 = arith.constant 16 : i32
    %20 = tpu.dynamic_rotate %19 by %c16_i32_9 dim 2 : vector<2x1x128xf32>, i32 -> vector<2x1x128xf32>
    %21 = arith.addf %19, %20 : vector<2x1x128xf32>
    %c32_i32_10 = arith.constant 32 : i32
    %22 = tpu.dynamic_rotate %21 by %c32_i32_10 dim 2 : vector<2x1x128xf32>, i32 -> vector<2x1x128xf32>
    %23 = arith.addf %21, %22 : vector<2x1x128xf32>
    %c64_i32_11 = arith.constant 64 : i32
    %24 = tpu.dynamic_rotate %23 by %c64_i32_11 dim 2 : vector<2x1x128xf32>, i32 -> vector<2x1x128xf32>
    %25 = arith.addf %23, %24 : vector<2x1x128xf32>
    %26 = arith.mulf %25, %15 : vector<2x1x128xf32>
    %27 = arith.subf %0, %26 : vector<2x1x128xf32>
    %28 = arith.mulf %27, %1 : vector<2x1x128xf32>
    %29 = arith.mulf %28, %28 : vector<2x1x128xf32>
    %cst_12 = arith.constant dense<0.000000e+00> : vector<2x128xf32>
    %30 = vector.multi_reduction <add>, %29, %cst_12 [1] : vector<2x1x128xf32> to vector<2x128xf32>
    %31 = vector.shape_cast %30 : vector<2x128xf32> to vector<2x1x128xf32>
    %c8_i32_13 = arith.constant 8 : i32
    %32 = tpu.dynamic_rotate %31 by %c8_i32_13 dim 2 : vector<2x1x128xf32>, i32 -> vector<2x1x128xf32>
    %33 = arith.addf %31, %32 : vector<2x1x128xf32>
    %c16_i32_14 = arith.constant 16 : i32
    %34 = tpu.dynamic_rotate %33 by %c16_i32_14 dim 2 : vector<2x1x128xf32>, i32 -> vector<2x1x128xf32>
    %35 = arith.addf %33, %34 : vector<2x1x128xf32>
    %c32_i32_15 = arith.constant 32 : i32
    %36 = tpu.dynamic_rotate %35 by %c32_i32_15 dim 2 : vector<2x1x128xf32>, i32 -> vector<2x1x128xf32>
    %37 = arith.addf %35, %36 : vector<2x1x128xf32>
    %c64_i32_16 = arith.constant 64 : i32
    %38 = tpu.dynamic_rotate %37 by %c64_i32_16 dim 2 : vector<2x1x128xf32>, i32 -> vector<2x1x128xf32>
    %39 = arith.addf %37, %38 : vector<2x1x128xf32>
    %40 = arith.mulf %39, %15 : vector<2x1x128xf32>
    %cst_17 = arith.constant 9.99999974E-6 : f32
    %41 = vector.broadcast %cst_17 : f32 to vector<2x1x128xf32>
    %42 = arith.addf %40, %41 : vector<2x1x128xf32>
    %43 = math.rsqrt %42 : vector<2x1x128xf32>
    %44 = arith.mulf %42, %43 : vector<2x1x128xf32>
    %45 = arith.mulf %28, %43 : vector<2x1x128xf32>
    %c0_18 = arith.constant 0 : index
    %c0_19 = arith.constant 0 : index
    %c0_20 = arith.constant 0 : index
    %46 = vector.load %arg4[%c0_18, %c0_19, %c0_20] : memref<2x1x128xf32, #tpu.memory_space<vmem>>, vector<2x1x128xf32>
    tpu.vector_store %arg4[%c0_18, %c0_19, %c0_20], %45 {strides = array<i32>} : memref<2x1x128xf32, #tpu.memory_space<vmem>>, vector<2x1x128xf32>,
    %c0_21 = arith.constant 0 : index
    %c0_22 = arith.constant 0 : index
    %c0_23 = arith.constant 0 : index
    %47 = vector.load %arg5[%c0_21, %c0_22, %c0_23] : memref<2x2x128xf32, #tpu.memory_space<vmem>>, vector<2x1x128xf32>
    tpu.vector_store %arg5[%c0_21, %c0_22, %c0_23], %44 {strides = array<i32>} : memref<2x2x128xf32, #tpu.memory_space<vmem>>, vector<2x1x128xf32>,
    %c0_24 = arith.constant 0 : index
    %c1 = arith.constant 1 : index
    %c0_25 = arith.constant 0 : index
    %48 = vector.load %arg5[%c0_24, %c1, %c0_25] : memref<2x2x128xf32, #tpu.memory_space<vmem>>, vector<2x1x128xf32>
    tpu.vector_store %arg5[%c0_24, %c1, %c0_25], %26 {strides = array<i32>} : memref<2x2x128xf32, #tpu.memory_space<vmem>>, vector<2x1x128xf32>,
    return
  }
  func.func @transform_0(%arg0: i32, %arg1: i32) -> (i32, i32, i32) {
    %c0_i32 = arith.constant 0 : i32
    %c0_i32_0 = arith.constant 0 : i32
    return %arg0, %c0_i32, %arg1 : i32, i32, i32
  }
  func.func @transform_1(%arg0: i32, %arg1: i32) -> (i32, i32, i32) {
    %c0_i32 = arith.constant 0 : i32
    %c0_i32_0 = arith.constant 0 : i32
    return %arg0, %c0_i32, %arg1 : i32, i32, i32
  }
  func.func @transform_2(%arg0: i32, %arg1: i32) -> (i32, i32, i32) {
    %c0_i32 = arith.constant 0 : i32
    %c0_i32_0 = arith.constant 0 : i32
    return %arg0, %c0_i32, %arg1 : i32, i32, i32
  }
  func.func @transform_3(%arg0: i32, %arg1: i32) -> (i32, i32, i32) {
    %c0_i32 = arith.constant 0 : i32
    %c0_i32_0 = arith.constant 0 : i32
    return %arg0, %c0_i32, %arg1 : i32, i32, i32
  }
}

</mosaic_0001>

<llo_original>
// kernel: tpu_custom_call.1
$region0: #{tpu_custom_call.1}
  #allocation0 [shape = 'u32[]', space=smem, size = 0x4, offset = 0x4, fixed_abs, tag = 'smem constant byte address 0x4 - core index']
  #allocation1 [shape = 'u32[144,128]{1,0:T(1,128)}', space=vmem, size = 0x12000, scoped, tag = 'internal scratch']
  %s0 = inlined_call_operand.hbm [shape: f32[2,1,128], index: 0, kind: input, shape index: {}]
  %s1 = inlined_call_operand.vmem [shape: f32[2,1,128], index: 1, kind: input, shape index: {}]
  %s2 = inlined_call_operand.hbm [shape: f32[2,1,128], index: 2, kind: output, shape index: {0}]
  %s3 = inlined_call_operand.hbm [shape: f32[2,2,128], index: 3, kind: output, shape index: {1}]
  %4 = xla_tuple %s2, %s3
  %s5 = sld [smem:[#allocation0]]
  $region30: #{tpu_custom_call.1} parent=0
    _
  %s7 = ssub.s32 1, %s5
  %s8 = scalar_select 0, %s7, %s5
  $region1: #{tpu_custom_call.1} parent=0
    #allocation2 [shape = 'u8[1024]{0}', space=vmem, size = 0x400, scoped, tag = 'input window, operand 0, single buffered']
    #allocation3 [shape = 's32[1]{0}', space=sflag, size = 0x4, scoped, tag = 'scoped memory for tpu_custom_call.1']
    #allocation4 [shape = 's32[1]{0}', space=sflag, size = 0x4, scoped, tag = 'scoped memory for tpu_custom_call.1']
    #allocation5 [shape = 'u8[1024]{0}', space=vmem, size = 0x400, scoped, tag = 'output window, operand 0, single buffered']
    #allocation6 [shape = 'u8[2048]{0}', space=vmem, size = 0x800, scoped, tag = 'output window, operand 1, single buffered']
    #allocation7 [shape = 's32[1]{0}', space=sflag, size = 0x4, scoped, tag = 'scoped memory for tpu_custom_call.1']
    %9 = vsyncpa [#allocation3], 0
    %10 = vsyncpa [#allocation4], 0
    %11 = vsyncpa [#allocation7], 0
    // Predicated region
    $region2: #{tpu_custom_call.1} parent=1 // pred_check
      _
    $region3: #{tpu_custom_call.1} parent=1 // pred_check_branch
      %13 = sbr.rel (0) target = $region5
    $region4: #{tpu_custom_call.1} parent=1 // pred_region
      %s15 = ssub.s32 32, 32
      %16 = vsyncadd [#allocation3], %s15
      %s17 = sshll.u32 [#allocation2], 4
      %s18 = int_to_ptr.vmem [resolvable:$true] %s17
      %23 = dma.hbm_to_vmem [thread:$0]  %s0, 32, %s18, [#allocation3], 16, 16, 1
    $region5: #{tpu_custom_call.1} parent=1 // pred_fallthru
      _
    // Predicated region
    $region6: #{tpu_custom_call.1} parent=1 // pred_check
      _
    $region7: #{tpu_custom_call.1} parent=1 // pred_check_branch
      %25 = sbr.rel (0) target = $region9
    $region8: #{tpu_custom_call.1} parent=1 // pred_region
      _
    $region9: #{tpu_custom_call.1} parent=1 // pred_fallthru
      _
    // Predicated region
    $region10: #{tpu_custom_call.1} parent=1 // pred_check
      _
    $region11: #{tpu_custom_call.1} parent=1 // pred_check_branch
      %27 = sbr.rel (0) target = $region13
    $region12: #{tpu_custom_call.1} parent=1 // pred_region
      %28 = dma.done [#allocation3], 32
    $region13: #{tpu_custom_call.1} parent=1 // pred_fallthru
      _
    %v29 = vld [vmem:[#allocation2] sm:$0x1]
    %v30 = vld [vmem:[#allocation2 + $0x1] sm:$0x1]
    %v31 = vld [vmem:[%s1] sm:$0x1]
    %v32 = vld [vmem:[%s1 + $0x1] sm:$0x1]
    %v33 = vadd.f32 %v31, 0.0
    %v34 = vadd.f32 %v32, 0.0
    %35 = vrot.lane.b32.xlu0 %v33, 8
    %v36 = vpop.permute.xlu0 %35
    %37 = vrot.lane.b32.xlu0 %v34, 8
    %v38 = vpop.permute.xlu0 %37
    %v39 = vadd.f32 %v33, %v36
    %v40 = vadd.f32 %v34, %v38
    %41 = vrot.lane.b32.xlu0 %v39, 16
    %v42 = vpop.permute.xlu0 %41
    %43 = vrot.lane.b32.xlu0 %v40, 16
    %v44 = vpop.permute.xlu0 %43
    %v45 = vadd.f32 %v39, %v42
    %v46 = vadd.f32 %v40, %v44
    %47 = vrot.lane.b32.xlu0 %v45, 32
    %v48 = vpop.permute.xlu0 %47
    %49 = vrot.lane.b32.xlu0 %v46, 32
    %v50 = vpop.permute.xlu0 %49
    %v51 = vadd.f32 %v45, %v48
    %v52 = vadd.f32 %v46, %v50
    %53 = vrot.lane.b32.xlu0 %v51, 64
    %v54 = vpop.permute.xlu0 %53
    %55 = vrot.lane.b32.xlu0 %v52, 64
    %v56 = vpop.permute.xlu0 %55
    %v57 = vadd.f32 %v51, %v54
    %v58 = vadd.f32 %v52, %v56
    %v59 = vmax.f32 %v57, 1.0
    %v60 = vmax.f32 %v58, 1.0
    %v61 = vrcp.pop %v59
    %v62 = vmul.f32 1.0, %v61
    %v63 = vrcp.pop %v60
    %v64 = vmul.f32 1.0, %v63
    %v65 = vadd.f32 %v29, 0.0
    %v66 = vadd.f32 %v30, 0.0
    %67 = vrot.lane.b32.xlu0 %v65, 8
    %v68 = vpop.permute.xlu0 %67
    %69 = vrot.lane.b32.xlu0 %v66, 8
    %v70 = vpop.permute.xlu0 %69
    %v71 = vadd.f32 %v65, %v68
    %v72 = vadd.f32 %v66, %v70
    %73 = vrot.lane.b32.xlu0 %v71, 16
    %v74 = vpop.permute.xlu0 %73
    %75 = vrot.lane.b32.xlu0 %v72, 16
    %v76 = vpop.permute.xlu0 %75
    %v77 = vadd.f32 %v71, %v74
    %v78 = vadd.f32 %v72, %v76
    %79 = vrot.lane.b32.xlu0 %v77, 32
    %v80 = vpop.permute.xlu0 %79
    %81 = vrot.lane.b32.xlu0 %v78, 32
    %v82 = vpop.permute.xlu0 %81
    %v83 = vadd.f32 %v77, %v80
    %v84 = vadd.f32 %v78, %v82
    %85 = vrot.lane.b32.xlu0 %v83, 64
    %v86 = vpop.permute.xlu0 %85
    %87 = vrot.lane.b32.xlu0 %v84, 64
    %v88 = vpop.permute.xlu0 %87
    %v89 = vadd.f32 %v83, %v86
    %v90 = vadd.f32 %v84, %v88
    %v91 = vmul.f32 %v89, %v62
    %v92 = vmul.f32 %v90, %v64
    %v93 = vsub.f32 %v29, %v91
    %v94 = vsub.f32 %v30, %v92
    %v95 = vmul.f32 %v93, %v31
    %v96 = vmul.f32 %v94, %v32
    %v97 = vmul.f32 %v95, %v95
    %v98 = vmul.f32 %v96, %v96
    %v99 = vadd.f32 %v97, 0.0
    %v100 = vadd.f32 %v98, 0.0
    %101 = vrot.lane.b32.xlu0 %v99, 8
    %v102 = vpop.permute.xlu0 %101
    %103 = vrot.lane.b32.xlu0 %v100, 8
    %v104 = vpop.permute.xlu0 %103
    %v105 = vadd.f32 %v99, %v102
    %v106 = vadd.f32 %v100, %v104
    %107 = vrot.lane.b32.xlu0 %v105, 16
    %v108 = vpop.permute.xlu0 %107
    %109 = vrot.lane.b32.xlu0 %v106, 16
    %v110 = vpop.permute.xlu0 %109
    %v111 = vadd.f32 %v105, %v108
    %v112 = vadd.f32 %v106, %v110
    %113 = vrot.lane.b32.xlu0 %v111, 32
    %v114 = vpop.permute.xlu0 %113
    %115 = vrot.lane.b32.xlu0 %v112, 32
    %v116 = vpop.permute.xlu0 %115
    %v117 = vadd.f32 %v111, %v114
    %v118 = vadd.f32 %v112, %v116
    %119 = vrot.lane.b32.xlu0 %v117, 64
    %v120 = vpop.permute.xlu0 %119
    %121 = vrot.lane.b32.xlu0 %v118, 64
    %v122 = vpop.permute.xlu0 %121
    %v123 = vadd.f32 %v117, %v120
    %v124 = vadd.f32 %v118, %v122
    %v125 = vmul.f32 %v123, %v62
    %v126 = vmul.f32 %v124, %v64
    %v127 = vadd.f32 %v125, 1e-05
    %v128 = vadd.f32 %v126, 1e-05
    %v129 = vrsqrt.pop %v127
    %v130 = vrsqrt.pop %v128
    %v131 = vmul.f32 %v127, %v129
    %v132 = vmul.f32 %v128, %v130
    %v133 = vmul.f32 %v95, %v129
    %v134 = vmul.f32 %v96, %v130
    %135 = vst [vmem:[#allocation5] sm:$0x1] %v133
    %136 = vst [vmem:[#allocation5 + $0x1] sm:$0x1] %v134
    %137 = vst [vmem:[#allocation6] sm:$0x1] %v131
    %138 = vst [vmem:[#allocation6 + $0x2] sm:$0x1] %v132
    %139 = vst [vmem:[#allocation6 + $0x1] sm:$0x1] %v91
    %140 = vst [vmem:[#allocation6 + $0x3] sm:$0x1] %v92
    // Predicated region
    $region14: #{tpu_custom_call.1} parent=1 // pred_check
      _
    $region15: #{tpu_custom_call.1} parent=1 // pred_check_branch
      %142 = sbr.rel (0) target = $region17
    $region16: #{tpu_custom_call.1} parent=1 // pred_region
      %s144 = ssub.s32 32, 32
      %145 = vsyncadd [#allocation4], %s144
      %s146 = sshll.u32 [#allocation5], 4
      %s147 = int_to_ptr.vmem [resolvable:$true] %s146
      %152 = dma.vmem_to_hbm [thread:$0]  %s147, 32, %s2, [#allocation4], 16, 16, 1
    $region17: #{tpu_custom_call.1} parent=1 // pred_fallthru
      _
    // Predicated region
    $region18: #{tpu_custom_call.1} parent=1 // pred_check
      _
    $region19: #{tpu_custom_call.1} parent=1 // pred_check_branch
      %154 = sbr.rel (0) target = $region21
    $region20: #{tpu_custom_call.1} parent=1 // pred_region
      %s156 = ssub.s32 64, 64
      %157 = vsyncadd [#allocation7], %s156
      %s158 = sshll.u32 [#allocation6], 4
      %s159 = int_to_ptr.vmem [resolvable:$true] %s158
      %164 = dma.vmem_to_hbm [thread:$0]  %s159, 64, %s3, [#allocation7], 32, 32, 2
    $region21: #{tpu_custom_call.1} parent=1 // pred_fallthru
      _
    // Predicated region
    $region22: #{tpu_custom_call.1} parent=1 // pred_check
      _
    $region23: #{tpu_custom_call.1} parent=1 // pred_check_branch
      %166 = sbr.rel (0) target = $region25
    $region24: #{tpu_custom_call.1} parent=1 // pred_region
      %167 = dma.done [#allocation4], 32
    $region25: #{tpu_custom_call.1} parent=1 // pred_fallthru
      _
    // Predicated region
    $region26: #{tpu_custom_call.1} parent=1 // pred_check
      _
    $region27: #{tpu_custom_call.1} parent=1 // pred_check_branch
      %169 = sbr.rel (0) target = $region29
    $region28: #{tpu_custom_call.1} parent=1 // pred_region
      %170 = dma.done [#allocation7], 64
    $region29: #{tpu_custom_call.1} parent=1 // pred_fallthru
      _
    %171 = vsyncpa [#allocation3], 1
    %172 = vsyncpa [#allocation4], 1
    %173 = vsyncpa [#allocation7], 1

</llo_original>
